<compile_context>
chip_gen: v7x
topology: tpu7x:2x2x1
jax: 0.10.0
libtpu: 0.0.40
codegen_flags: <defaults>
</compile_context>

<pallas_src>
import math

import jax
import jax.numpy as jnp
from jax.experimental import pallas as pl
from jax.experimental.pallas import tpu as pltpu

_INV_SQRT2 = 1.0 / math.sqrt(2.0)


def aux_kernel(x_ref, w1_ref, b1_ref, w2_ref, b2_ref, o_ref):
    # x: (TM, K), w1: (K, Dp), b1: (1, Dp), w2: (Dp, Dp), b2: (1, Dp), o: (TM, Dp)
    x = x_ref[...]
    w1 = w1_ref[...]
    tm = x.shape[0]
    k_dim = w1.shape[0]
    d_pad = w1.shape[1]

    # First linear with tiny K: unrolled VPU broadcast FMAs (keeps the MXU out of
    # a depth-3 contraction that would otherwise need padding to depth 128).
    h = jnp.broadcast_to(b1_ref[...], (tm, d_pad))
    for k in range(k_dim):
        h = h + x[:, k:k + 1] * w1[k:k + 1, :]

    # Exact GELU (erf-based), matches torch.nn.functional.gelu default.
    h = 0.5 * h * (1.0 + jax.lax.erf(h * _INV_SQRT2))

    # Second linear: (TM, Dp) @ (Dp, Dp) + (1, Dp) on the MXU with f32 accumulation.
    out = jnp.dot(h, w2_ref[...], preferred_element_type=jnp.float32)
    out = out + b2_ref[...]
    o_ref[...] = out.astype(o_ref.dtype)


def _round_up(v, m):
    return ((v + m - 1) // m) * m


def _pick_tm(n, d_pad, tm_max):
    """Largest row tile (multiple of 8, <= tm_max) whose working set fits a
    conservative VMEM budget on all current TPU generations."""
    tile_budget = 24 * 1024 * 1024  # bytes reserved for the per-row tiles + temporaries
    # Per row (f32): x double-buffered (lane-padded to 128) + out double-buffered
    # + h/out temporaries, all of width d_pad.
    bytes_per_row = 4 * (2 * 128 + 4 * d_pad)
    tm_fit = max(tile_budget // bytes_per_row, 8)
    tm = min(tm_max, tm_fit, _round_up(max(n, 1), 8))
    tm = max((tm // 8) * 8, 8)
    return tm


def aux_forward(x, w1, b1, w2, b2, *, tm_max=4096):
    """x: (..., 3) float32. Weights stored as (in, out). Returns (..., aux_dim) float32."""
    lead_shape = x.shape[:-1]
    in_dim = x.shape[-1]
    aux_dim = w1.shape[1]

    x2d = x.reshape(-1, in_dim)
    n = x2d.shape[0]

    # ---- Lane-dense feature dim: pad aux_dim up to a multiple of 128 with zeros. ----
    d_pad = _round_up(aux_dim, 128)
    pad_d = d_pad - aux_dim
    w1_p = jnp.pad(w1, ((0, 0), (0, pad_d)))                      # (K, Dp)
    b1_p = jnp.pad(b1.reshape(1, aux_dim), ((0, 0), (0, pad_d)))  # (1, Dp)
    w2_p = jnp.pad(w2, ((0, pad_d), (0, pad_d)))                  # (Dp, Dp)
    b2_p = jnp.pad(b2.reshape(1, aux_dim), ((0, 0), (0, pad_d)))  # (1, Dp)

    # ---- Row tiling: pick TM (multiple of 8, VMEM-safe), pad N up to a multiple of TM.
    tm = _pick_tm(n, d_pad, tm_max)
    n_pad = _round_up(max(n, 1), tm)
    if n_pad != n:
        x2d = jnp.pad(x2d, ((0, n_pad - n), (0, 0)))

    grid = (n_pad // tm,)

    # Resident weights + double-buffered row tiles, with headroom for compiler scratch.
    weight_bytes = 4 * 2 * (d_pad * d_pad + 3 * 8 * d_pad)
    tile_bytes = 4 * tm * (2 * 128 + 4 * d_pad)
    vmem_limit = min(int((weight_bytes + tile_bytes) * 1.5) + (4 << 20), 48 << 20)

    out = pl.pallas_call(
        aux_kernel,
        out_shape=jax.ShapeDtypeStruct((n_pad, d_pad), jnp.float32),
        grid_spec=pltpu.PrefetchScalarGridSpec(
            num_scalar_prefetch=0,
            grid=grid,
            in_specs=[
                pl.BlockSpec((tm, in_dim), lambda i: (i, 0)),      # X: tiled over rows
                pl.BlockSpec((in_dim, d_pad), lambda i: (0, 0)),   # W1: resident
                pl.BlockSpec((1, d_pad), lambda i: (0, 0)),        # b1: resident
                pl.BlockSpec((d_pad, d_pad), lambda i: (0, 0)),    # W2: resident
                pl.BlockSpec((1, d_pad), lambda i: (0, 0)),        # b2: resident
            ],
            out_specs=pl.BlockSpec((tm, d_pad), lambda i: (i, 0)),
        ),
        compiler_params=pltpu.CompilerParams(
            dimension_semantics=("parallel",),
            vmem_limit_bytes=vmem_limit,
        ),
    )(x2d, w1_p, b1_p, w2_p, b2_p)

    out = out[:n, :aux_dim]
    return out.reshape(*lead_shape, aux_dim)


def init_params(key, aux_dim, in_dim=3):
    """Deterministic parameter init mirroring nn.Linear's default
    (uniform(-1/sqrt(fan_in), 1/sqrt(fan_in)))."""
    k1, k2, k3, k4 = jax.random.split(key, 4)
    bound1 = 1.0 / math.sqrt(in_dim)
    bound2 = 1.0 / math.sqrt(aux_dim)
    # Stored as (in, out) so the kernel computes x @ W (== torch's x @ W.T).
    w1 = jax.random.uniform(k1, (in_dim, aux_dim), jnp.float32, -bound1, bound1)
    b1 = jax.random.uniform(k2, (aux_dim,), jnp.float32, -bound1, bound1)
    w2 = jax.random.uniform(k3, (aux_dim, aux_dim), jnp.float32, -bound2, bound2)
    b2 = jax.random.uniform(k4, (aux_dim,), jnp.float32, -bound2, bound2)
    return w1, b1, w2, b2


if __name__ == "__main__":
    aux_dim = 32
    key = jax.random.PRNGKey(0)
    k_param, k_x = jax.random.split(key)

    w1, b1, w2, b2 = init_params(k_param, aux_dim)

    # Small input consistent with the module: X has last dim 3.
    x = jax.random.normal(k_x, (2, 8, 3), jnp.float32)

    out = aux_forward(x, w1, b1, w2, b2)
    out = jax.block_until_ready(out)

    # Pure-JAX reference (exact GELU, same weights).
    ref = jnp.dot(x, w1) + b1
    ref = 0.5 * ref * (1.0 + jax.lax.erf(ref / jnp.sqrt(2.0)))
    ref = jnp.dot(ref, w2) + b2

    assert out.shape == (2, 8, aux_dim)
    assert jnp.allclose(out, ref, atol=1e-5, rtol=1e-5)

    print("KERNEL_OK")
</pallas_src>

<mosaic_0001>
module attributes {stable_mosaic.version = 11 : i64} {
  func.func @aux_kernel(%arg0: i32, %arg1: memref<16x3xf32, #tpu.memory_space<vmem>>, %arg2: memref<3x128xf32, #tpu.memory_space<vmem>>, %arg3: memref<1x128xf32, #tpu.memory_space<vmem>>, %arg4: memref<128x128xf32, #tpu.memory_space<vmem>>, %arg5: memref<1x128xf32, #tpu.memory_space<vmem>>, %arg6: memref<16x128xf32, #tpu.memory_space<vmem>>) attributes {dimension_semantics = [#tpu.dimension_semantics<parallel>], iteration_bounds = array<i64: 1>, scalar_prefetch = 0 : i64, scratch_operands = 0 : i64, tpu.core_type = #tpu.core_type<tc>, window_params = [{transform_indices = @transform_0, window_bounds = array<i64: 16, 3>}, {pipeline_mode = #tpu.pipeline_mode<synchronous>, transform_indices = @transform_1, window_bounds = array<i64: 3, 128>}, {pipeline_mode = #tpu.pipeline_mode<synchronous>, transform_indices = @transform_2, window_bounds = array<i64: 1, 128>}, {pipeline_mode = #tpu.pipeline_mode<synchronous>, transform_indices = @transform_3, window_bounds = array<i64: 128, 128>}, {pipeline_mode = #tpu.pipeline_mode<synchronous>, transform_indices = @transform_4, window_bounds = array<i64: 1, 128>}, {transform_indices = @transform_5, window_bounds = array<i64: 16, 128>}]} {
    %c0 = arith.constant 0 : index
    %c0_0 = arith.constant 0 : index
    %0 = vector.load %arg1[%c0, %c0_0] : memref<16x3xf32, #tpu.memory_space<vmem>>, vector<16x3xf32>
    %c0_1 = arith.constant 0 : index
    %c0_2 = arith.constant 0 : index
    %1 = vector.load %arg2[%c0_1, %c0_2] : memref<3x128xf32, #tpu.memory_space<vmem>>, vector<3x128xf32>
    %c0_3 = arith.constant 0 : index
    %c0_4 = arith.constant 0 : index
    %2 = vector.load %arg3[%c0_3, %c0_4] : memref<1x128xf32, #tpu.memory_space<vmem>>, vector<1x128xf32>
    %3 = vector.shape_cast %2 : vector<1x128xf32> to vector<1x128xf32>
    %4 = vector.broadcast %3 : vector<1x128xf32> to vector<16x128xf32>
    %5 = vector.extract_strided_slice %0 {offsets = [0, 0], sizes = [16, 1], strides = [1, 1]} : vector<16x3xf32> to vector<16x1xf32>
    %6 = vector.extract_strided_slice %1 {offsets = [0, 0], sizes = [1, 128], strides = [1, 1]} : vector<3x128xf32> to vector<1x128xf32>
    %7 = vector.broadcast %5 : vector<16x1xf32> to vector<16x128xf32>
    %8 = vector.broadcast %6 : vector<1x128xf32> to vector<16x128xf32>
    %9 = arith.mulf %7, %8 : vector<16x128xf32>
    %10 = arith.addf %4, %9 : vector<16x128xf32>
    %11 = vector.extract_strided_slice %0 {offsets = [0, 1], sizes = [16, 1], strides = [1, 1]} : vector<16x3xf32> to vector<16x1xf32>
    %12 = vector.extract_strided_slice %1 {offsets = [1, 0], sizes = [1, 128], strides = [1, 1]} : vector<3x128xf32> to vector<1x128xf32>
    %13 = vector.broadcast %11 : vector<16x1xf32> to vector<16x128xf32>
    %14 = vector.broadcast %12 : vector<1x128xf32> to vector<16x128xf32>
    %15 = arith.mulf %13, %14 : vector<16x128xf32>
    %16 = arith.addf %10, %15 : vector<16x128xf32>
    %17 = vector.extract_strided_slice %0 {offsets = [0, 2], sizes = [16, 1], strides = [1, 1]} : vector<16x3xf32> to vector<16x1xf32>
    %18 = vector.extract_strided_slice %1 {offsets = [2, 0], sizes = [1, 128], strides = [1, 1]} : vector<3x128xf32> to vector<1x128xf32>
    %19 = vector.broadcast %17 : vector<16x1xf32> to vector<16x128xf32>
    %20 = vector.broadcast %18 : vector<1x128xf32> to vector<16x128xf32>
    %21 = arith.mulf %19, %20 : vector<16x128xf32>
    %22 = arith.addf %16, %21 : vector<16x128xf32>
    %cst = arith.constant 5.000000e-01 : f32
    %23 = vector.broadcast %cst : f32 to vector<16x128xf32>
    %24 = arith.mulf %23, %22 : vector<16x128xf32>
    %cst_5 = arith.constant 0.707106769 : f32
    %25 = vector.broadcast %cst_5 : f32 to vector<16x128xf32>
    %26 = arith.mulf %22, %25 : vector<16x128xf32>
    %27 = math.erf %26 : vector<16x128xf32>
    %cst_6 = arith.constant 1.000000e+00 : f32
    %28 = vector.broadcast %cst_6 : f32 to vector<16x128xf32>
    %29 = arith.addf %28, %27 : vector<16x128xf32>
    %30 = arith.mulf %24, %29 : vector<16x128xf32>
    %c0_7 = arith.constant 0 : index
    %c0_8 = arith.constant 0 : index
    %31 = vector.load %arg4[%c0_7, %c0_8] : memref<128x128xf32, #tpu.memory_space<vmem>>, vector<128x128xf32>
    %cst_9 = arith.constant dense<0.000000e+00> : vector<16x128xf32>
    %32 = tpu.matmul %30, %31, %cst_9 {dimension_numbers = #tpu.dot_dimension_numbers<[1], [0], [0], [1], [0, 0, 1, 1], [], []>} : vector<16x128xf32>, vector<128x128xf32>, vector<16x128xf32> -> vector<16x128xf32>
    %c0_10 = arith.constant 0 : index
    %c0_11 = arith.constant 0 : index
    %33 = vector.load %arg5[%c0_10, %c0_11] : memref<1x128xf32, #tpu.memory_space<vmem>>, vector<1x128xf32>
    %34 = vector.broadcast %33 : vector<1x128xf32> to vector<16x128xf32>
    %35 = arith.addf %32, %34 : vector<16x128xf32>
    %c0_12 = arith.constant 0 : index
    %c0_13 = arith.constant 0 : index
    %36 = vector.load %arg6[%c0_12, %c0_13] : memref<16x128xf32, #tpu.memory_space<vmem>>, vector<16x128xf32>
    tpu.vector_store %arg6[%c0_12, %c0_13], %35 {strides = array<i32>} : memref<16x128xf32, #tpu.memory_space<vmem>>, vector<16x128xf32>,
    return
  }
  func.func @transform_0(%arg0: i32) -> (i32, i32) {
    %c0_i32 = arith.constant 0 : i32
    %c0_i32_0 = arith.constant 0 : i32
    return %arg0, %c0_i32 : i32, i32
  }
  func.func @transform_1(%arg0: i32) -> (i32, i32) {
    %c0_i32 = arith.constant 0 : i32
    %c0_i32_0 = arith.constant 0 : i32
    %c0_i32_1 = arith.constant 0 : i32
    return %c0_i32, %c0_i32_0 : i32, i32
  }
  func.func @transform_2(%arg0: i32) -> (i32, i32) {
    %c0_i32 = arith.constant 0 : i32
    %c0_i32_0 = arith.constant 0 : i32
    %c0_i32_1 = arith.constant 0 : i32
    return %c0_i32, %c0_i32_0 : i32, i32
  }
  func.func @transform_3(%arg0: i32) -> (i32, i32) {
    %c0_i32 = arith.constant 0 : i32
    %c0_i32_0 = arith.constant 0 : i32
    %c0_i32_1 = arith.constant 0 : i32
    return %c0_i32, %c0_i32_0 : i32, i32
  }
  func.func @transform_4(%arg0: i32) -> (i32, i32) {
    %c0_i32 = arith.constant 0 : i32
    %c0_i32_0 = arith.constant 0 : i32
    %c0_i32_1 = arith.constant 0 : i32
    return %c0_i32, %c0_i32_0 : i32, i32
  }
  func.func @transform_5(%arg0: i32) -> (i32, i32) {
    %c0_i32 = arith.constant 0 : i32
    %c0_i32_0 = arith.constant 0 : i32
    return %arg0, %c0_i32 : i32, i32
  }
}

</mosaic_0001>

<llo_original>
// kernel: tpu_custom_call.1
$region0: #{tpu_custom_call.1}
  #allocation0 [shape = 'u32[]', space=smem, size = 0x4, offset = 0x4, fixed_abs, tag = 'smem constant byte address 0x4 - core index']
  #allocation1 [shape = 'u32[144,128]{1,0:T(1,128)}', space=vmem, size = 0x12000, scoped, tag = 'internal scratch']
  %s0 = inlined_call_operand.vmem [shape: f32[16,3], index: 0, kind: input, shape index: {}]
  %s1 = inlined_call_operand.vmem [shape: f32[3,128], index: 1, kind: input, shape index: {}]
  %s2 = inlined_call_operand.vmem [shape: f32[1,128], index: 2, kind: input, shape index: {}]
  %s3 = inlined_call_operand.hbm [shape: f32[128,128], index: 3, kind: input, shape index: {}]
  %s4 = inlined_call_operand.vmem [shape: f32[1,128], index: 4, kind: input, shape index: {}]
  %s5 = inlined_call_operand.hbm [shape: f32[16,128], index: 5, kind: output, shape index: {}]
  %s6 = sld [smem:[#allocation0]]
  $region34: #{tpu_custom_call.1} parent=0
    _
  %s8 = ssub.s32 1, %s6
  %s9 = scalar_select 0, %s8, %s6
  $region1: #{tpu_custom_call.1} parent=0
    #allocation2 [shape = 'u8[65536]{0}', space=vmem, size = 0x10000, scoped, tag = 'input window, operand 3, single buffered']
    #allocation3 [shape = 's32[1]{0}', space=sflag, size = 0x4, scoped, tag = 'scoped memory for tpu_custom_call.1']
    #allocation4 [shape = 's32[1]{0}', space=sflag, size = 0x4, scoped, tag = 'scoped memory for tpu_custom_call.1']
    #allocation5 [shape = 'u8[8192]{0}', space=vmem, size = 0x2000, scoped, tag = 'output window, operand 0, single buffered']
    %10 = vsyncpa [#allocation3], 0
    %11 = vsyncpa [#allocation4], 0
    // Predicated region
    $region2: #{tpu_custom_call.1} parent=1 // pred_check
      _
    $region3: #{tpu_custom_call.1} parent=1 // pred_check_branch
      %13 = sbr.rel (0) target = $region5
    $region4: #{tpu_custom_call.1} parent=1 // pred_region
      _
    $region5: #{tpu_custom_call.1} parent=1 // pred_fallthru
      _
    // Predicated region
    $region6: #{tpu_custom_call.1} parent=1 // pred_check
      _
    $region7: #{tpu_custom_call.1} parent=1 // pred_check_branch
      %15 = sbr.rel (0) target = $region9
    $region8: #{tpu_custom_call.1} parent=1 // pred_region
      _
    $region9: #{tpu_custom_call.1} parent=1 // pred_fallthru
      _
    // Predicated region
    $region10: #{tpu_custom_call.1} parent=1 // pred_check
      _
    $region11: #{tpu_custom_call.1} parent=1 // pred_check_branch
      %17 = sbr.rel (0) target = $region13
    $region12: #{tpu_custom_call.1} parent=1 // pred_region
      _
    $region13: #{tpu_custom_call.1} parent=1 // pred_fallthru
      _
    // Predicated region
    $region14: #{tpu_custom_call.1} parent=1 // pred_check
      _
    $region15: #{tpu_custom_call.1} parent=1 // pred_check_branch
      %19 = sbr.rel (0) target = $region17
    $region16: #{tpu_custom_call.1} parent=1 // pred_region
      %s21 = ssub.s32 2048, 2048
      %22 = vsyncadd [#allocation3], %s21
      %s23 = sshll.u32 [#allocation2], 4
      %s24 = int_to_ptr.vmem [resolvable:$true] %s23
      %29 = dma.hbm_to_vmem [thread:$0]  %s3, 2048, %s24, [#allocation3], 128, 128, 8
    $region17: #{tpu_custom_call.1} parent=1 // pred_fallthru
      _
    // Predicated region
    $region18: #{tpu_custom_call.1} parent=1 // pred_check
      _
    $region19: #{tpu_custom_call.1} parent=1 // pred_check_branch
      %31 = sbr.rel (0) target = $region21
    $region20: #{tpu_custom_call.1} parent=1 // pred_region
      _
    $region21: #{tpu_custom_call.1} parent=1 // pred_fallthru
      _
    // Predicated region
    $region22: #{tpu_custom_call.1} parent=1 // pred_check
      _
    $region23: #{tpu_custom_call.1} parent=1 // pred_check_branch
      %33 = sbr.rel (0) target = $region25
    $region24: #{tpu_custom_call.1} parent=1 // pred_region
      %34 = dma.done [#allocation3], 2048
    $region25: #{tpu_custom_call.1} parent=1 // pred_fallthru
      _
    %v35 = vld [vmem:[%s0] sm:$0xff]
    %v36 = vld [vmem:[%s0 + $0x8] sm:$0xff]
    %v37 = vld [vmem:[%s1] sm:$0x7]
    %v38 = vld [vmem:[%s2] sm:$0x1]
    %v40 = vlaneseq
    %v41 = vshrl.u32 %v40, 7
    %v42 = vsub.s32 0, %v41
    %v43 = vrot.slane %v38, %v42
    %46 = vset.pattern.permute.xlu0 0
    %47 = vperm.xlu0 %46, %v35
    %v48 = vpop.permute.xlu0 %47
    %51 = vset.pattern.permute.xlu0 0
    %52 = vperm.xlu0 %51, %v36
    %v53 = vpop.permute.xlu0 %52
    %v55 = vlaneseq
    %v56 = vshrl.u32 %v55, 7
    %v57 = vsub.s32 0, %v56
    %v58 = vrot.slane %v37, %v57
    %v59 = vmul.f32 %v48, %v58
    %v60 = vmul.f32 %v53, %v58
    %v61 = vadd.f32 %v43, %v59
    %v62 = vadd.f32 %v43, %v60
    %63 = vset.pattern.permute.xlu0 1
    %64 = vperm.xlu0 %63, %v35
    %v65 = vpop.permute.xlu0 %64
    %67 = vset.pattern.permute.xlu0 1
    %68 = vperm.xlu0 %67, %v36
    %v69 = vpop.permute.xlu0 %68
    %v71 = vlaneseq
    %v72 = vshrl.u32 %v71, 7
    %v73 = vsub.s32 1, %v72
    %v74 = vrot.slane %v37, %v73
    %v75 = vmul.f32 %v65, %v74
    %v76 = vmul.f32 %v69, %v74
    %v77 = vadd.f32 %v61, %v75
    %v78 = vadd.f32 %v62, %v76
    %79 = vset.pattern.permute.xlu0 2
    %80 = vperm.xlu0 %79, %v35
    %v81 = vpop.permute.xlu0 %80
    %83 = vset.pattern.permute.xlu0 2
    %84 = vperm.xlu0 %83, %v36
    %v85 = vpop.permute.xlu0 %84
    %v87 = vlaneseq
    %v88 = vshrl.u32 %v87, 7
    %v89 = vsub.s32 2, %v88
    %v90 = vrot.slane %v37, %v89
    %v91 = vmul.f32 %v81, %v90
    %v92 = vmul.f32 %v85, %v90
    %v93 = vadd.f32 %v77, %v91
    %v94 = vadd.f32 %v78, %v92
    %v95 = vmul.f32 %v93, 0.5
    %v96 = vmul.f32 %v94, 0.5
    %v97 = vmul.f32 %v93, 0.70710677
    %v98 = vmul.f32 %v94, 0.70710677
    %v99 = verf.f32.pop %v97
    %v100 = verf.f32.pop %v98
    %v101 = vadd.f32 %v99, 1.0
    %v102 = vadd.f32 %v100, 1.0
    %v103 = vmul.f32 %v95, %v101
    %v104 = vmul.f32 %v96, %v102
    %v105 = vld [vmem:[#allocation2] sm:$0xff]
    %v106 = vld [vmem:[#allocation2 + $0x8] sm:$0xff]
    %v107 = vld [vmem:[#allocation2 + $0x10] sm:$0xff]
    %v108 = vld [vmem:[#allocation2 + $0x18] sm:$0xff]
    %v109 = vld [vmem:[#allocation2 + $0x20] sm:$0xff]
    %v110 = vld [vmem:[#allocation2 + $0x28] sm:$0xff]
    %v111 = vld [vmem:[#allocation2 + $0x30] sm:$0xff]
    %v112 = vld [vmem:[#allocation2 + $0x38] sm:$0xff]
    %v113 = vld [vmem:[#allocation2 + $0x40] sm:$0xff]
    %v114 = vld [vmem:[#allocation2 + $0x48] sm:$0xff]
    %v115 = vld [vmem:[#allocation2 + $0x50] sm:$0xff]
    %v116 = vld [vmem:[#allocation2 + $0x58] sm:$0xff]
    %v117 = vld [vmem:[#allocation2 + $0x60] sm:$0xff]
    %v118 = vld [vmem:[#allocation2 + $0x68] sm:$0xff]
    %v119 = vld [vmem:[#allocation2 + $0x70] sm:$0xff]
    %v120 = vld [vmem:[#allocation2 + $0x78] sm:$0xff]
    %v121 = vld [vmem:[%s4] sm:$0x1]
    %v123 = vlaneseq
    %v124 = vshrl.u32 %v123, 7
    %v125 = vsub.s32 0, %v124
    %v126 = vrot.slane %v121, %v125
    %128 = vmatprep.subr.mxu0 0.0
    %129 = vmatpush1.msra.mxu0 %v105
    %130 = vmatprep.subr.mxu0 0.0
    %131 = vmatpush1.msra.mxu0 %v106
    %132 = vmatprep.subr.mxu0 0.0
    %133 = vmatpush1.msra.mxu0 %v107
    %134 = vmatprep.subr.mxu0 0.0
    %135 = vmatpush1.msra.mxu0 %v108
    %136 = vmatprep.subr.mxu0 0.0
    %137 = vmatpush1.msra.mxu0 %v109
    %138 = vmatprep.subr.mxu0 0.0
    %139 = vmatpush1.msra.mxu0 %v110
    %140 = vmatprep.subr.mxu0 0.0
    %141 = vmatpush1.msra.mxu0 %v111
    %142 = vmatprep.subr.mxu0 0.0
    %143 = vmatpush1.msra.mxu0 %v112
    %144 = vmatprep.subr.mxu0 0.0
    %145 = vmatpush1.msra.mxu0 %v113
    %146 = vmatprep.subr.mxu0 0.0
    %147 = vmatpush1.msra.mxu0 %v114
    %148 = vmatprep.subr.mxu0 0.0
    %149 = vmatpush1.msra.mxu0 %v115
    %150 = vmatprep.subr.mxu0 0.0
    %151 = vmatpush1.msra.mxu0 %v116
    %152 = vmatprep.subr.mxu0 0.0
    %153 = vmatpush1.msra.mxu0 %v117
    %154 = vmatprep.subr.mxu0 0.0
    %155 = vmatpush1.msra.mxu0 %v118
    %156 = vmatprep.subr.mxu0 0.0
    %157 = vmatpush1.msra.mxu0 %v119
    %158 = vmatprep.subr.mxu0 0.0
    %159 = vmatpush1.msra.mxu0 %v120
    %160 = vmatprep.subr.mxu0 0.0
    %161 = vmatpush1.msra.mxu0 0.0
    %162 = vmatprep.subr.mxu0 0.0
    %163 = vmatpush1.msra.mxu0 0.0
    %164 = vmatprep.subr.mxu0 0.0
    %165 = vmatpush1.msra.mxu0 0.0
    %166 = vmatprep.subr.mxu0 0.0
    %167 = vmatpush1.msra.mxu0 0.0
    %168 = vmatprep.subr.mxu0 0.0
    %169 = vmatpush1.msra.mxu0 0.0
    %170 = vmatprep.subr.mxu0 0.0
    %171 = vmatpush1.msra.mxu0 0.0
    %172 = vmatprep.subr.mxu0 0.0
    %173 = vmatpush1.msra.mxu0 0.0
    %174 = vmatprep.subr.mxu0 0.0
    %175 = vmatpush1.msra.mxu0 0.0
    %176 = vmatprep.subr.mxu0 0.0
    %177 = vmatpush1.msra.mxu0 0.0
    %178 = vmatprep.subr.mxu0 0.0
    %179 = vmatpush1.msra.mxu0 0.0
    %180 = vmatprep.subr.mxu0 0.0
    %181 = vmatpush1.msra.mxu0 0.0
    %182 = vmatprep.subr.mxu0 0.0
    %183 = vmatpush1.msra.mxu0 0.0
    %184 = vmatprep.subr.mxu0 0.0
    %185 = vmatpush1.msra.mxu0 0.0
    %186 = vmatprep.subr.mxu0 0.0
    %187 = vmatpush1.msra.mxu0 0.0
    %188 = vmatprep.subr.mxu0 0.0
    %189 = vmatpush1.msra.mxu0 0.0
    %190 = vmatprep.subr.mxu0 0.0
    %191 = vmatpush1.msra.mxu0 0.0
    %192 = vmatprep.mubr.f32.mxu0 0.0
    %193 = vmatmul.mubr.f32.gmra.mrb[0].mxu0 %v103
    %v194 = vpop.f32.mrb[0].mxu0
    %v195 = vadd.f32 %v126, %v194
    %v196 = vpop.f32.mrb[0].mxu0
    %197 = vmatprep.mubr.f32.mxu0 0.0
    %198 = vmatmul.mubr.f32.gmra.mrb[0].mxu0 %v104
    %v199 = vpop.f32.mrb[0].mxu0
    %v200 = vadd.f32 %v126, %v199
    %v201 = vpop.f32.mrb[0].mxu0
    %202 = vdwg.mxu0
    %203 = vst [vmem:[#allocation5] sm:$0xff] %v195
    %204 = vst [vmem:[#allocation5 + $0x8] sm:$0xff] %v200
    // Predicated region
    $region26: #{tpu_custom_call.1} parent=1 // pred_check
      _
    $region27: #{tpu_custom_call.1} parent=1 // pred_check_branch
      %206 = sbr.rel (0) target = $region29
    $region28: #{tpu_custom_call.1} parent=1 // pred_region
      %s208 = ssub.s32 256, 256
      %209 = vsyncadd [#allocation4], %s208
      %s210 = sshll.u32 [#allocation5], 4
      %s211 = int_to_ptr.vmem [resolvable:$true] %s210
      %216 = dma.vmem_to_hbm [thread:$0]  %s211, 256, %s5, [#allocation4], 128, 128, 8
    $region29: #{tpu_custom_call.1} parent=1 // pred_fallthru
      _
    // Predicated region
    $region30: #{tpu_custom_call.1} parent=1 // pred_check
      _
    $region31: #{tpu_custom_call.1} parent=1 // pred_check_branch
      %218 = sbr.rel (0) target = $region33
    $region32: #{tpu_custom_call.1} parent=1 // pred_region
      %219 = dma.done [#allocation4], 256
    $region33: #{tpu_custom_call.1} parent=1 // pred_fallthru
      _
    %220 = vsyncpa [#allocation3], 1
    %221 = vsyncpa [#allocation4], 1

</llo_original>
